<compile_context>
chip_gen: v5e
topology: v5e:2x2
jax: 0.10.0
libtpu: 0.0.40
codegen_flags: <defaults>
</compile_context>

<pallas_src>
import jax
import jax.numpy as jnp
from jax.experimental import pallas as pl
from jax.experimental.pallas import tpu as pltpu

HID = 256        # hidden width of both inner layers
OUT = 784        # output width (28*28)
TB_MAX = 1024    # max batch tile: keeps per-tile working set modest on v7x


def _round_up(x, m):
    return ((x + m - 1) // m) * m


def _cdiv(a, b):
    return -(-a // b)


def _choose_tb(B):
    """Adaptive batch tile:
       * multiple of 16 (bf16 sublane packing),
       * >= 2 grid steps whenever B > 16 (v7x megacore; harmless on v5e/v6e),
       * capped at TB_MAX to bound per-step VMEM,
       * sized so the last tile is not mostly padding for awkward B."""
    if B <= 16:
        return 16
    n_tiles = max(2, _cdiv(B, TB_MAX))
    return min(_round_up(_cdiv(B, n_tiles), 16), TB_MAX)


def _generator_kernel(x_ref, w1_ref, b1_ref, w2_ref, b2_ref, w3_ref, b3_ref,
                      o_ref):
    # Fused 3-layer MLP on one batch tile:
    #   matmuls -> MXU (bf16 operands, f32 accumulation)
    #   bias add / ReLU -> VPU (f32)
    #   tanh -> EUP (f32), then cast to bf16 for the HBM writeback
    x = x_ref[...]                                                  # bf16

    h1 = jnp.dot(x, w1_ref[...], preferred_element_type=jnp.float32)
    h1 = jnp.maximum(h1 + b1_ref[...], 0.0)                         # ReLU, f32

    h2 = jnp.dot(h1.astype(jnp.bfloat16), w2_ref[...],
                 preferred_element_type=jnp.float32)
    h2 = jnp.maximum(h2 + b2_ref[...], 0.0)                         # ReLU, f32

    h3 = jnp.dot(h2.astype(jnp.bfloat16), w3_ref[...],
                 preferred_element_type=jnp.float32)
    o_ref[...] = jnp.tanh(h3 + b3_ref[...]).astype(o_ref.dtype)     # Tanh->bf16


def prepare_params(params):
    """One-time prep: transpose PyTorch (out,in) weights to (in,out), cast
    weights to bf16 for the MXU, keep f32 biases as (1,out) rows, and
    zero-pad the first-layer contraction dim to a multiple of 128 so the x
    tile is lane-dense and the first matmul feeds a full MXU K."""
    in_dim = params["w1"].shape[1]
    k_pad = _round_up(in_dim, 128)

    w1 = params["w1"].T.astype(jnp.float32)                   # (in, 256)
    w1 = jnp.pad(w1, ((0, k_pad - in_dim), (0, 0))).astype(jnp.bfloat16)
    w2 = params["w2"].T.astype(jnp.bfloat16)                  # (256, 256)
    w3 = params["w3"].T.astype(jnp.bfloat16)                  # (256, 784)

    b1 = params["b1"].reshape(1, -1).astype(jnp.float32)      # (1, 256)
    b2 = params["b2"].reshape(1, -1).astype(jnp.float32)      # (1, 256)
    b3 = params["b3"].reshape(1, -1).astype(jnp.float32)      # (1, 784)
    return {"w1": w1, "b1": b1, "w2": w2, "b2": b2, "w3": w3, "b3": b3}


def generator_forward(x, prep):
    """x: (B, input_size) float32. prep: output of prepare_params().
    Returns (B, 784) bfloat16 (tanh output; upcast downstream if needed)."""
    B, in_dim = x.shape
    k_pad = prep["w1"].shape[0]

    TB = _choose_tb(B)
    B_pad = _round_up(B, TB)

    # Pad batch rows (garbage rows sliced off below) and contraction lanes
    # (zero columns contribute nothing to the matmul).
    x_pad = jnp.pad(x, ((0, B_pad - B), (0, k_pad - in_dim))).astype(jnp.bfloat16)

    grid = (B_pad // TB,)

    # x/out tiles move with the grid; weights/biases are pinned (constant
    # index_map) so Pallas keeps them resident in VMEM across iterations.
    in_specs = [
        pl.BlockSpec((TB, k_pad), lambda i: (i, 0)),       # x tile
        pl.BlockSpec((k_pad, HID), lambda i: (0, 0)),      # w1 (K padded)
        pl.BlockSpec((1, HID), lambda i: (0, 0)),          # b1
        pl.BlockSpec((HID, HID), lambda i: (0, 0)),        # w2
        pl.BlockSpec((1, HID), lambda i: (0, 0)),          # b2
        pl.BlockSpec((HID, OUT), lambda i: (0, 0)),        # w3
        pl.BlockSpec((1, OUT), lambda i: (0, 0)),          # b3
    ]
    out_spec = pl.BlockSpec((TB, OUT), lambda i: (i, 0))

    out_padded = pl.pallas_call(
        _generator_kernel,
        out_shape=jax.ShapeDtypeStruct((B_pad, OUT), jnp.bfloat16),
        grid=grid,
        in_specs=in_specs,
        out_specs=out_spec,
        compiler_params=pltpu.CompilerParams(
            dimension_semantics=("parallel",),     # megacore sharding on v7x
            vmem_limit_bytes=48 << 20,             # headroom for TB up to 1024
        ),
    )(x_pad, prep["w1"], prep["b1"], prep["w2"], prep["b2"],
      prep["w3"], prep["b3"])

    # Strip batch padding.
    return out_padded[:B, :]


def init_params(key, input_size):
    """Deterministic synthetic parameters matching the PyTorch module shapes
    (PyTorch layout: weight is (out, in))."""
    ks = jax.random.split(key, 6)

    def lin(kw, kb, fan_in, fan_out):
        bound = 1.0 / jnp.sqrt(fan_in)
        w = jax.random.uniform(kw, (fan_out, fan_in), jnp.float32,
                               minval=-bound, maxval=bound)
        b = jax.random.uniform(kb, (fan_out,), jnp.float32,
                               minval=-bound, maxval=bound)
        return w, b

    w1, b1 = lin(ks[0], ks[1], input_size, HID)
    w2, b2 = lin(ks[2], ks[3], HID, HID)
    w3, b3 = lin(ks[4], ks[5], HID, OUT)
    return {"w1": w1, "b1": b1, "w2": w2, "b2": b2, "w3": w3, "b3": b3}


def reference_forward_bf16(x, prep):
    """Reference with matching bf16-operand / f32-accumulate matmuls."""
    k_pad = prep["w1"].shape[0]
    xb = jnp.pad(x, ((0, 0), (0, k_pad - x.shape[1]))).astype(jnp.bfloat16)
    h1 = jnp.maximum(
        jnp.dot(xb, prep["w1"], preferred_element_type=jnp.float32)
        + prep["b1"], 0.0)
    h2 = jnp.maximum(
        jnp.dot(h1.astype(jnp.bfloat16), prep["w2"],
                preferred_element_type=jnp.float32) + prep["b2"], 0.0)
    h3 = (jnp.dot(h2.astype(jnp.bfloat16), prep["w3"],
                  preferred_element_type=jnp.float32) + prep["b3"])
    return jnp.tanh(h3)


def reference_forward_f32(x, params):
    """Pure f32 reference with original PyTorch-layout params."""
    h1 = jnp.maximum(x @ params["w1"].T + params["b1"], 0.0)
    h2 = jnp.maximum(h1 @ params["w2"].T + params["b2"], 0.0)
    return jnp.tanh(h2 @ params["w3"].T + params["b3"])


def _check(x, params, prep):
    out = jax.block_until_ready(generator_forward(x, prep))
    B = x.shape[0]
    assert out.shape == (B, OUT), out.shape
    assert out.dtype == jnp.bfloat16, out.dtype
    out_f32 = out.astype(jnp.float32)

    # Tight check vs a matching bf16-matmul reference (bf16 output rounding).
    ref_bf16 = reference_forward_bf16(x, prep)
    assert jnp.allclose(out_f32, ref_bf16, atol=1e-2, rtol=1e-2), \
        "mismatch vs bf16 reference"

    # Looser check vs the original f32 PyTorch semantics (bf16 MXU / output).
    ref_f32 = reference_forward_f32(x, params)
    assert jnp.allclose(out_f32, ref_f32, atol=6e-2, rtol=6e-2), \
        "mismatch vs f32 reference"
    return out


if __name__ == "__main__":
    key = jax.random.PRNGKey(0)
    k_x, k_x2, k_p = jax.random.split(key, 3)

    batch, input_size = 2, 32
    params = init_params(k_p, input_size)
    prep = prepare_params(params)   # one-time transpose / cast / pad

    # Small-batch path (single tile, grid=(1,)).
    x = jax.random.normal(k_x, (batch, input_size), jnp.float32)
    _check(x, params, prep)

    # Multi-tile path (adaptive TB -> grid=(2,), exercises batch padding).
    x2 = jax.random.normal(k_x2, (160, input_size), jnp.float32)
    _check(x2, params, prep)

    print("KERNEL_OK")
</pallas_src>

<mosaic_0001>
module attributes {stable_mosaic.version = 11 : i64} {
  func.func @_generator_kernel(%arg0: i32, %arg1: memref<16x128xbf16, #tpu.memory_space<vmem>>, %arg2: memref<128x256xbf16, #tpu.memory_space<vmem>>, %arg3: memref<1x256xf32, #tpu.memory_space<vmem>>, %arg4: memref<256x256xbf16, #tpu.memory_space<vmem>>, %arg5: memref<1x256xf32, #tpu.memory_space<vmem>>, %arg6: memref<256x784xbf16, #tpu.memory_space<vmem>>, %arg7: memref<1x784xf32, #tpu.memory_space<vmem>>, %arg8: memref<16x784xbf16, #tpu.memory_space<vmem>>) attributes {dimension_semantics = [#tpu.dimension_semantics<parallel>], iteration_bounds = array<i64: 1>, scalar_prefetch = 0 : i64, scratch_operands = 0 : i64, tpu.core_type = #tpu.core_type<tc>, window_params = [{transform_indices = @transform_0, window_bounds = array<i64: 16, 128>}, {pipeline_mode = #tpu.pipeline_mode<synchronous>, transform_indices = @transform_1, window_bounds = array<i64: 128, 256>}, {pipeline_mode = #tpu.pipeline_mode<synchronous>, transform_indices = @transform_2, window_bounds = array<i64: 1, 256>}, {pipeline_mode = #tpu.pipeline_mode<synchronous>, transform_indices = @transform_3, window_bounds = array<i64: 256, 256>}, {pipeline_mode = #tpu.pipeline_mode<synchronous>, transform_indices = @transform_4, window_bounds = array<i64: 1, 256>}, {pipeline_mode = #tpu.pipeline_mode<synchronous>, transform_indices = @transform_5, window_bounds = array<i64: 256, 784>}, {pipeline_mode = #tpu.pipeline_mode<synchronous>, transform_indices = @transform_6, window_bounds = array<i64: 1, 784>}, {transform_indices = @transform_7, window_bounds = array<i64: 16, 784>}]} {
    %c0 = arith.constant 0 : index
    %c0_0 = arith.constant 0 : index
    %0 = vector.load %arg1[%c0, %c0_0] : memref<16x128xbf16, #tpu.memory_space<vmem>>, vector<16x128xbf16>
    %c0_1 = arith.constant 0 : index
    %c0_2 = arith.constant 0 : index
    %1 = vector.load %arg2[%c0_1, %c0_2] : memref<128x256xbf16, #tpu.memory_space<vmem>>, vector<128x256xbf16>
    %cst = arith.constant dense<0.000000e+00> : vector<16x256xf32>
    %2 = tpu.matmul %0, %1, %cst {dimension_numbers = #tpu.dot_dimension_numbers<[1], [0], [0], [1], [0, 0, 1, 1], [], []>} : vector<16x128xbf16>, vector<128x256xbf16>, vector<16x256xf32> -> vector<16x256xf32>
    %c0_3 = arith.constant 0 : index
    %c0_4 = arith.constant 0 : index
    %3 = vector.load %arg3[%c0_3, %c0_4] : memref<1x256xf32, #tpu.memory_space<vmem>>, vector<1x256xf32>
    %4 = vector.broadcast %3 : vector<1x256xf32> to vector<16x256xf32>
    %5 = arith.addf %2, %4 : vector<16x256xf32>
    %cst_5 = arith.constant 0.000000e+00 : f32
    %6 = vector.broadcast %cst_5 : f32 to vector<16x256xf32>
    %7 = arith.maximumf %5, %6 : vector<16x256xf32>
    %8 = arith.truncf %7 : vector<16x256xf32> to vector<16x256xbf16>
    %c0_6 = arith.constant 0 : index
    %c0_7 = arith.constant 0 : index
    %9 = vector.load %arg4[%c0_6, %c0_7] : memref<256x256xbf16, #tpu.memory_space<vmem>>, vector<256x256xbf16>
    %cst_8 = arith.constant dense<0.000000e+00> : vector<16x256xf32>
    %10 = tpu.matmul %8, %9, %cst_8 {dimension_numbers = #tpu.dot_dimension_numbers<[1], [0], [0], [1], [0, 0, 1, 1], [], []>} : vector<16x256xbf16>, vector<256x256xbf16>, vector<16x256xf32> -> vector<16x256xf32>
    %c0_9 = arith.constant 0 : index
    %c0_10 = arith.constant 0 : index
    %11 = vector.load %arg5[%c0_9, %c0_10] : memref<1x256xf32, #tpu.memory_space<vmem>>, vector<1x256xf32>
    %12 = vector.broadcast %11 : vector<1x256xf32> to vector<16x256xf32>
    %13 = arith.addf %10, %12 : vector<16x256xf32>
    %cst_11 = arith.constant 0.000000e+00 : f32
    %14 = vector.broadcast %cst_11 : f32 to vector<16x256xf32>
    %15 = arith.maximumf %13, %14 : vector<16x256xf32>
    %16 = arith.truncf %15 : vector<16x256xf32> to vector<16x256xbf16>
    %c0_12 = arith.constant 0 : index
    %c0_13 = arith.constant 0 : index
    %17 = vector.load %arg6[%c0_12, %c0_13] : memref<256x784xbf16, #tpu.memory_space<vmem>>, vector<256x784xbf16>
    %cst_14 = arith.constant dense<0.000000e+00> : vector<16x784xf32>
    %18 = tpu.matmul %16, %17, %cst_14 {dimension_numbers = #tpu.dot_dimension_numbers<[1], [0], [0], [1], [0, 0, 1, 1], [], []>} : vector<16x256xbf16>, vector<256x784xbf16>, vector<16x784xf32> -> vector<16x784xf32>
    %c0_15 = arith.constant 0 : index
    %c0_16 = arith.constant 0 : index
    %19 = vector.load %arg7[%c0_15, %c0_16] : memref<1x784xf32, #tpu.memory_space<vmem>>, vector<1x784xf32>
    %20 = vector.broadcast %19 : vector<1x784xf32> to vector<16x784xf32>
    %21 = arith.addf %18, %20 : vector<16x784xf32>
    %22 = math.tanh %21 : vector<16x784xf32>
    %23 = arith.truncf %22 : vector<16x784xf32> to vector<16x784xbf16>
    %c0_17 = arith.constant 0 : index
    %c0_18 = arith.constant 0 : index
    %24 = vector.load %arg8[%c0_17, %c0_18] : memref<16x784xbf16, #tpu.memory_space<vmem>>, vector<16x784xbf16>
    tpu.vector_store %arg8[%c0_17, %c0_18], %23 {strides = array<i32>} : memref<16x784xbf16, #tpu.memory_space<vmem>>, vector<16x784xbf16>,
    return
  }
  func.func @transform_0(%arg0: i32) -> (i32, i32) {
    %c0_i32 = arith.constant 0 : i32
    %c0_i32_0 = arith.constant 0 : i32
    return %arg0, %c0_i32 : i32, i32
  }
  func.func @transform_1(%arg0: i32) -> (i32, i32) {
    %c0_i32 = arith.constant 0 : i32
    %c0_i32_0 = arith.constant 0 : i32
    %c0_i32_1 = arith.constant 0 : i32
    return %c0_i32, %c0_i32_0 : i32, i32
  }
  func.func @transform_2(%arg0: i32) -> (i32, i32) {
    %c0_i32 = arith.constant 0 : i32
    %c0_i32_0 = arith.constant 0 : i32
    %c0_i32_1 = arith.constant 0 : i32
    return %c0_i32, %c0_i32_0 : i32, i32
  }
  func.func @transform_3(%arg0: i32) -> (i32, i32) {
    %c0_i32 = arith.constant 0 : i32
    %c0_i32_0 = arith.constant 0 : i32
    %c0_i32_1 = arith.constant 0 : i32
    return %c0_i32, %c0_i32_0 : i32, i32
  }
  func.func @transform_4(%arg0: i32) -> (i32, i32) {
    %c0_i32 = arith.constant 0 : i32
    %c0_i32_0 = arith.constant 0 : i32
    %c0_i32_1 = arith.constant 0 : i32
    return %c0_i32, %c0_i32_0 : i32, i32
  }
  func.func @transform_5(%arg0: i32) -> (i32, i32) {
    %c0_i32 = arith.constant 0 : i32
    %c0_i32_0 = arith.constant 0 : i32
    %c0_i32_1 = arith.constant 0 : i32
    return %c0_i32, %c0_i32_0 : i32, i32
  }
  func.func @transform_6(%arg0: i32) -> (i32, i32) {
    %c0_i32 = arith.constant 0 : i32
    %c0_i32_0 = arith.constant 0 : i32
    %c0_i32_1 = arith.constant 0 : i32
    return %c0_i32, %c0_i32_0 : i32, i32
  }
  func.func @transform_7(%arg0: i32) -> (i32, i32) {
    %c0_i32 = arith.constant 0 : i32
    %c0_i32_0 = arith.constant 0 : i32
    return %arg0, %c0_i32 : i32, i32
  }
}

</mosaic_0001>

<llo_original>
// kernel: tpu_custom_call.1
$region0: #{tpu_custom_call.1}
  #allocation0 [shape = 'u32[]', space=smem, size = 0x4, offset = 0x4, fixed_abs, tag = 'smem constant byte address 0x4 - core index']
  #allocation1 [shape = 'u32[72,128]{1,0:T(1,128)}', space=vmem, size = 0x9000, scoped, tag = 'internal scratch']
  %s0 = inlined_call_operand.vmem [shape: bf16[16,128], index: 0, kind: input, shape index: {}]
  %s1 = inlined_call_operand.vmem [shape: bf16[128,256], index: 1, kind: input, shape index: {}]
  %s2 = inlined_call_operand.vmem [shape: f32[1,256], index: 2, kind: input, shape index: {}]
  %s3 = inlined_call_operand.vmem [shape: bf16[256,256], index: 3, kind: input, shape index: {}]
  %s4 = inlined_call_operand.vmem [shape: f32[1,256], index: 4, kind: input, shape index: {}]
  %s5 = inlined_call_operand.vmem [shape: bf16[256,784], index: 5, kind: input, shape index: {}]
  %s6 = inlined_call_operand.vmem [shape: f32[1,784], index: 6, kind: input, shape index: {}]
  %s7 = inlined_call_operand.hbm [shape: bf16[16,784], index: 7, kind: output, shape index: {}]
  %s8 = sld [smem:[#allocation0]]
  $region38: #{tpu_custom_call.1} parent=0
    _
  %s10 = ssub.s32 1, %s8
  %s11 = scalar_select 0, %s10, %s8
  $region1: #{tpu_custom_call.1} parent=0
    #allocation2 [shape = 'u8[28672]{0}', space=vmem, size = 0x7000, scoped, tag = 'output window, operand 0, single buffered']
    #allocation3 [shape = 's32[1]{0}', space=sflag, size = 0x4, scoped, tag = 'scoped memory for tpu_custom_call.1']
    %12 = vsyncpa [#allocation3], 0
    // Predicated region
    $region2: #{tpu_custom_call.1} parent=1 // pred_check
      _
    $region3: #{tpu_custom_call.1} parent=1 // pred_check_branch
      %14 = sbr.rel (0) target = $region5
    $region4: #{tpu_custom_call.1} parent=1 // pred_region
      _
    $region5: #{tpu_custom_call.1} parent=1 // pred_fallthru
      _
    // Predicated region
    $region6: #{tpu_custom_call.1} parent=1 // pred_check
      _
    $region7: #{tpu_custom_call.1} parent=1 // pred_check_branch
      %16 = sbr.rel (0) target = $region9
    $region8: #{tpu_custom_call.1} parent=1 // pred_region
      _
    $region9: #{tpu_custom_call.1} parent=1 // pred_fallthru
      _
    // Predicated region
    $region10: #{tpu_custom_call.1} parent=1 // pred_check
      _
    $region11: #{tpu_custom_call.1} parent=1 // pred_check_branch
      %18 = sbr.rel (0) target = $region13
    $region12: #{tpu_custom_call.1} parent=1 // pred_region
      _
    $region13: #{tpu_custom_call.1} parent=1 // pred_fallthru
      _
    // Predicated region
    $region14: #{tpu_custom_call.1} parent=1 // pred_check
      _
    $region15: #{tpu_custom_call.1} parent=1 // pred_check_branch
      %20 = sbr.rel (0) target = $region17
    $region16: #{tpu_custom_call.1} parent=1 // pred_region
      _
    $region17: #{tpu_custom_call.1} parent=1 // pred_fallthru
      _
    // Predicated region
    $region18: #{tpu_custom_call.1} parent=1 // pred_check
      _
    $region19: #{tpu_custom_call.1} parent=1 // pred_check_branch
      %22 = sbr.rel (0) target = $region21
    $region20: #{tpu_custom_call.1} parent=1 // pred_region
      _
    $region21: #{tpu_custom_call.1} parent=1 // pred_fallthru
      _
    // Predicated region
    $region22: #{tpu_custom_call.1} parent=1 // pred_check
      _
    $region23: #{tpu_custom_call.1} parent=1 // pred_check_branch
      %24 = sbr.rel (0) target = $region25
    $region24: #{tpu_custom_call.1} parent=1 // pred_region
      _
    $region25: #{tpu_custom_call.1} parent=1 // pred_fallthru
      _
    // Predicated region
    $region26: #{tpu_custom_call.1} parent=1 // pred_check
      _
    $region27: #{tpu_custom_call.1} parent=1 // pred_check_branch
      %26 = sbr.rel (0) target = $region29
    $region28: #{tpu_custom_call.1} parent=1 // pred_region
      _
    $region29: #{tpu_custom_call.1} parent=1 // pred_fallthru
      _
    %v27 = vld [vmem:[%s0] sm:$0xf]
    %v28 = vld [vmem:[%s0 + $0x4] sm:$0xf]
    %v29 = vld [vmem:[%s1] sm:$0xff]
    %v30 = vld [vmem:[%s1 + $0x8] sm:$0xff]
    %v31 = vld [vmem:[%s1 + $0x10] sm:$0xff]
    %v32 = vld [vmem:[%s1 + $0x18] sm:$0xff]
    %v33 = vld [vmem:[%s1 + $0x20] sm:$0xff]
    %v34 = vld [vmem:[%s1 + $0x28] sm:$0xff]
    %v35 = vld [vmem:[%s1 + $0x30] sm:$0xff]
    %v36 = vld [vmem:[%s1 + $0x38] sm:$0xff]
    %v37 = vld [vmem:[%s1 + $0x40] sm:$0xff]
    %v38 = vld [vmem:[%s1 + $0x48] sm:$0xff]
    %v39 = vld [vmem:[%s1 + $0x50] sm:$0xff]
    %v40 = vld [vmem:[%s1 + $0x58] sm:$0xff]
    %v41 = vld [vmem:[%s1 + $0x60] sm:$0xff]
    %v42 = vld [vmem:[%s1 + $0x68] sm:$0xff]
    %v43 = vld [vmem:[%s1 + $0x70] sm:$0xff]
    %v44 = vld [vmem:[%s1 + $0x78] sm:$0xff]
    %v45 = vld [vmem:[%s2] sm:$0x3]
    %v47 = vperm.slane %v45, 0
    %v48 = vperm.slane %v45, 1
    %v53 = vunpack.c.l.b16 %v27
    %v54 = vunpack.c.l.b16 %v28
    %v55 = vpack.c.b16 %v54, %v53
    %v73 = vunpack.c.l.b16 %v29
    %v74 = vunpack.c.h.b16 %v29
    %v75 = vunpack.c.l.b16 %v30
    %v76 = vunpack.c.h.b16 %v30
    %v77 = vunpack.c.l.b16 %v31
    %v78 = vunpack.c.h.b16 %v31
    %v79 = vunpack.c.l.b16 %v32
    %v80 = vunpack.c.h.b16 %v32
    %v81 = vunpack.c.l.b16 %v33
    %v82 = vunpack.c.h.b16 %v33
    %v83 = vunpack.c.l.b16 %v34
    %v84 = vunpack.c.h.b16 %v34
    %v85 = vunpack.c.l.b16 %v35
    %v86 = vunpack.c.h.b16 %v35
    %v87 = vunpack.c.l.b16 %v36
    %v88 = vunpack.c.h.b16 %v36
    %v89 = vunpack.c.l.b16 %v37
    %v90 = vunpack.c.h.b16 %v37
    %v91 = vunpack.c.l.b16 %v38
    %v92 = vunpack.c.h.b16 %v38
    %v93 = vunpack.c.l.b16 %v39
    %v94 = vunpack.c.h.b16 %v39
    %v95 = vunpack.c.l.b16 %v40
    %v96 = vunpack.c.h.b16 %v40
    %v97 = vunpack.c.l.b16 %v41
    %v98 = vunpack.c.h.b16 %v41
    %v99 = vunpack.c.l.b16 %v42
    %v100 = vunpack.c.h.b16 %v42
    %v101 = vunpack.c.l.b16 %v43
    %v102 = vunpack.c.h.b16 %v43
    %v103 = vunpack.c.l.b16 %v44
    %v104 = vunpack.c.h.b16 %v44
    %v105 = vpack.c.b16 %v75, %v73
    %v106 = vpack.c.b16 %v76, %v74
    %v107 = vpack.c.b16 %v79, %v77
    %v108 = vpack.c.b16 %v80, %v78
    %v109 = vpack.c.b16 %v83, %v81
    %v110 = vpack.c.b16 %v84, %v82
    %v111 = vpack.c.b16 %v87, %v85
    %v112 = vpack.c.b16 %v88, %v86
    %v113 = vpack.c.b16 %v91, %v89
    %v114 = vpack.c.b16 %v92, %v90
    %v115 = vpack.c.b16 %v95, %v93
    %v116 = vpack.c.b16 %v96, %v94
    %v117 = vpack.c.b16 %v99, %v97
    %v118 = vpack.c.b16 %v100, %v98
    %v119 = vpack.c.b16 %v103, %v101
    %v120 = vpack.c.b16 %v104, %v102
    %137 = vmatpush.bf16.msra.mxu0 %v119
    %138 = vmatpush.bf16.msra.mxu0 %v117
    %139 = vmatpush.bf16.msra.mxu0 %v115
    %140 = vmatpush.bf16.msra.mxu0 %v113
    %141 = vmatpush.bf16.msra.mxu0 %v111
    %142 = vmatpush.bf16.msra.mxu0 %v109
    %143 = vmatpush.bf16.msra.mxu0 %v107
    %144 = vmatpush.bf16.msra.mxu0 %v105
    %145 = vmatmul.bf16.gmra.mxu0 %v55
    %v146 = vpop.f32.mrf.mxu0
    %v147 = vadd.f32 %v47, %v146
    %v148 = vpop.f32.mrf.mxu0
    %v149 = vadd.f32 %v47, %v148
    %150 = vdwg.mxu0
    %151 = vmatpush.bf16.msra.mxu0 %v120
    %152 = vmatpush.bf16.msra.mxu0 %v118
    %153 = vmatpush.bf16.msra.mxu0 %v116
    %154 = vmatpush.bf16.msra.mxu0 %v114
    %155 = vmatpush.bf16.msra.mxu0 %v112
    %156 = vmatpush.bf16.msra.mxu0 %v110
    %157 = vmatpush.bf16.msra.mxu0 %v108
    %158 = vmatpush.bf16.msra.mxu0 %v106
    %159 = vmatmul.bf16.gmra.mxu0 %v55
    %v160 = vpop.f32.mrf.mxu0
    %v161 = vadd.f32 %v48, %v160
    %v162 = vpop.f32.mrf.mxu0
    %v163 = vadd.f32 %v48, %v162
    %164 = vdwg.mxu0
    %v165 = vmax.f32 %v147, 0.0
    %v166 = vmax.f32 %v161, 0.0
    %v167 = vmax.f32 %v149, 0.0
    %v168 = vmax.f32 %v163, 0.0
    %v169 = vpack.c.bf16 %v167, %v165
    %v170 = vpack.c.bf16 %v168, %v166
    %v171 = vld [vmem:[%s3] sm:$0xff]
    %v172 = vld [vmem:[%s3 + $0x8] sm:$0xff]
    %v173 = vld [vmem:[%s3 + $0x10] sm:$0xff]
    %v174 = vld [vmem:[%s3 + $0x18] sm:$0xff]
    %v175 = vld [vmem:[%s3 + $0x20] sm:$0xff]
    %v176 = vld [vmem:[%s3 + $0x28] sm:$0xff]
    %v177 = vld [vmem:[%s3 + $0x30] sm:$0xff]
    %v178 = vld [vmem:[%s3 + $0x38] sm:$0xff]
    %v179 = vld [vmem:[%s3 + $0x40] sm:$0xff]
    %v180 = vld [vmem:[%s3 + $0x48] sm:$0xff]
    %v181 = vld [vmem:[%s3 + $0x50] sm:$0xff]
    %v182 = vld [vmem:[%s3 + $0x58] sm:$0xff]
    %v183 = vld [vmem:[%s3 + $0x60] sm:$0xff]
    %v184 = vld [vmem:[%s3 + $0x68] sm:$0xff]
    %v185 = vld [vmem:[%s3 + $0x70] sm:$0xff]
    %v186 = vld [vmem:[%s3 + $0x78] sm:$0xff]
    %v187 = vld [vmem:[%s3 + $0x80] sm:$0xff]
    %v188 = vld [vmem:[%s3 + $0x88] sm:$0xff]
    %v189 = vld [vmem:[%s3 + $0x90] sm:$0xff]
    %v190 = vld [vmem:[%s3 + $0x98] sm:$0xff]
    %v191 = vld [vmem:[%s3 + $0xa0] sm:$0xff]
    %v192 = vld [vmem:[%s3 + $0xa8] sm:$0xff]
    %v193 = vld [vmem:[%s3 + $0xb0] sm:$0xff]
    %v194 = vld [vmem:[%s3 + $0xb8] sm:$0xff]
    %v195 = vld [vmem:[%s3 + $0xc0] sm:$0xff]
    %v196 = vld [vmem:[%s3 + $0xc8] sm:$0xff]
    %v197 = vld [vmem:[%s3 + $0xd0] sm:$0xff]
    %v198 = vld [vmem:[%s3 + $0xd8] sm:$0xff]
    %v199 = vld [vmem:[%s3 + $0xe0] sm:$0xff]
    %v200 = vld [vmem:[%s3 + $0xe8] sm:$0xff]
    %v201 = vld [vmem:[%s3 + $0xf0] sm:$0xff]
    %v202 = vld [vmem:[%s3 + $0xf8] sm:$0xff]
    %v203 = vld [vmem:[%s4] sm:$0x3]
    %v205 = vperm.slane %v203, 0
    %v206 = vperm.slane %v203, 1
    %v241 = vunpack.c.l.b16 %v171
    %v242 = vunpack.c.h.b16 %v171
    %v243 = vunpack.c.l.b16 %v172
    %v244 = vunpack.c.h.b16 %v172
    %v245 = vunpack.c.l.b16 %v173
    %v246 = vunpack.c.h.b16 %v173
    %v247 = vunpack.c.l.b16 %v174
    %v248 = vunpack.c.h.b16 %v174
    %v249 = vunpack.c.l.b16 %v175
    %v250 = vunpack.c.h.b16 %v175
    %v251 = vunpack.c.l.b16 %v176
    %v252 = vunpack.c.h.b16 %v176
    %v253 = vunpack.c.l.b16 %v177
    %v254 = vunpack.c.h.b16 %v177
    %v255 = vunpack.c.l.b16 %v178
    %v256 = vunpack.c.h.b16 %v178
    %v257 = vunpack.c.l.b16 %v179
    %v258 = vunpack.c.h.b16 %v179
    %v259 = vunpack.c.l.b16 %v180
    %v260 = vunpack.c.h.b16 %v180
    %v261 = vunpack.c.l.b16 %v181
    %v262 = vunpack.c.h.b16 %v181
    %v263 = vunpack.c.l.b16 %v182
    %v264 = vunpack.c.h.b16 %v182
    %v265 = vunpack.c.l.b16 %v183
    %v266 = vunpack.c.h.b16 %v183
    %v267 = vunpack.c.l.b16 %v184
    %v268 = vunpack.c.h.b16 %v184
    %v269 = vunpack.c.l.b16 %v185
    %v270 = vunpack.c.h.b16 %v185
    %v271 = vunpack.c.l.b16 %v186
    %v272 = vunpack.c.h.b16 %v186
    %v273 = vunpack.c.l.b16 %v187
    %v274 = vunpack.c.h.b16 %v187
    %v275 = vunpack.c.l.b16 %v188
    %v276 = vunpack.c.h.b16 %v188
    %v277 = vunpack.c.l.b16 %v189
    %v278 = vunpack.c.h.b16 %v189
    %v279 = vunpack.c.l.b16 %v190
    %v280 = vunpack.c.h.b16 %v190
    %v281 = vunpack.c.l.b16 %v191
    %v282 = vunpack.c.h.b16 %v191
    %v283 = vunpack.c.l.b16 %v192
    %v284 = vunpack.c.h.b16 %v192
    %v285 = vunpack.c.l.b16 %v193
    %v286 = vunpack.c.h.b16 %v193
    %v287 = vunpack.c.l.b16 %v194
    %v288 = vunpack.c.h.b16 %v194
    %v289 = vunpack.c.l.b16 %v195
    %v290 = vunpack.c.h.b16 %v195
    %v291 = vunpack.c.l.b16 %v196
    %v292 = vunpack.c.h.b16 %v196
    %v293 = vunpack.c.l.b16 %v197
    %v294 = vunpack.c.h.b16 %v197
    %v295 = vunpack.c.l.b16 %v198
    %v296 = vunpack.c.h.b16 %v198
    %v297 = vunpack.c.l.b16 %v199
    %v298 = vunpack.c.h.b16 %v199
    %v299 = vunpack.c.l.b16 %v200
    %v300 = vunpack.c.h.b16 %v200
    %v301 = vunpack.c.l.b16 %v201
    %v302 = vunpack.c.h.b16 %v201
    %v303 = vunpack.c.l.b16 %v202
    %v304 = vunpack.c.h.b16 %v202
    %v305 = vpack.c.b16 %v243, %v241
    %v306 = vpack.c.b16 %v244, %v242
    %v307 = vpack.c.b16 %v247, %v245
    %v308 = vpack.c.b16 %v248, %v246
    %v309 = vpack.c.b16 %v251, %v249
    %v310 = vpack.c.b16 %v252, %v250
    %v311 = vpack.c.b16 %v255, %v253
    %v312 = vpack.c.b16 %v256, %v254
    %v313 = vpack.c.b16 %v259, %v257
    %v314 = vpack.c.b16 %v260, %v258
    %v315 = vpack.c.b16 %v263, %v261
    %v316 = vpack.c.b16 %v264, %v262
    %v317 = vpack.c.b16 %v267, %v265
    %v318 = vpack.c.b16 %v268, %v266
    %v319 = vpack.c.b16 %v271, %v269
    %v320 = vpack.c.b16 %v272, %v270
    %v321 = vpack.c.b16 %v275, %v273
    %v322 = vpack.c.b16 %v276, %v274
    %v323 = vpack.c.b16 %v279, %v277
    %v324 = vpack.c.b16 %v280, %v278
    %v325 = vpack.c.b16 %v283, %v281
    %v326 = vpack.c.b16 %v284, %v282
    %v327 = vpack.c.b16 %v287, %v285
    %v328 = vpack.c.b16 %v288, %v286
    %v329 = vpack.c.b16 %v291, %v289
    %v330 = vpack.c.b16 %v292, %v290
    %v331 = vpack.c.b16 %v295, %v293
    %v332 = vpack.c.b16 %v296, %v294
    %v333 = vpack.c.b16 %v299, %v297
    %v334 = vpack.c.b16 %v300, %v298
    %v335 = vpack.c.b16 %v303, %v301
    %v336 = vpack.c.b16 %v304, %v302
    %369 = vmatpush.bf16.msra.mxu0 %v319
    %370 = vmatpush.bf16.msra.mxu0 %v317
    %371 = vmatpush.bf16.msra.mxu0 %v315
    %372 = vmatpush.bf16.msra.mxu0 %v313
    %373 = vmatpush.bf16.msra.mxu0 %v311
    %374 = vmatpush.bf16.msra.mxu0 %v309
    %375 = vmatpush.bf16.msra.mxu0 %v307
    %376 = vmatpush.bf16.msra.mxu0 %v305
    %377 = vmatmul.bf16.gmra.mxu0 %v169
    %v378 = vpop.f32.mrf.mxu0
    %v379 = vadd.f32 %v205, %v378
    %v380 = vpop.f32.mrf.mxu0
    %v381 = vadd.f32 %v205, %v380
    %382 = vdwg.mxu0
    %383 = vmatpush.bf16.msra.mxu0 %v335
    %384 = vmatpush.bf16.msra.mxu0 %v333
    %385 = vmatpush.bf16.msra.mxu0 %v331
    %386 = vmatpush.bf16.msra.mxu0 %v329
    %387 = vmatpush.bf16.msra.mxu0 %v327
    %388 = vmatpush.bf16.msra.mxu0 %v325
    %389 = vmatpush.bf16.msra.mxu0 %v323
    %390 = vmatpush.bf16.msra.mxu0 %v321
    %391 = vmatmul.bf16.gmra.mxu0 %v170
    %v392 = vpop.f32.mrf.mxu0
    %v393 = vadd.f32 %v379, %v392
    %v394 = vpop.f32.mrf.mxu0
    %v395 = vadd.f32 %v381, %v394
    %396 = vdwg.mxu0
    %397 = vmatpush.bf16.msra.mxu0 %v320
    %398 = vmatpush.bf16.msra.mxu0 %v318
    %399 = vmatpush.bf16.msra.mxu0 %v316
    %400 = vmatpush.bf16.msra.mxu0 %v314
    %401 = vmatpush.bf16.msra.mxu0 %v312
    %402 = vmatpush.bf16.msra.mxu0 %v310
    %403 = vmatpush.bf16.msra.mxu0 %v308
    %404 = vmatpush.bf16.msra.mxu0 %v306
    %405 = vmatmul.bf16.gmra.mxu0 %v169
    %v406 = vpop.f32.mrf.mxu0
    %v407 = vadd.f32 %v206, %v406
    %v408 = vpop.f32.mrf.mxu0
    %v409 = vadd.f32 %v206, %v408
    %410 = vdwg.mxu0
    %411 = vmatpush.bf16.msra.mxu0 %v336
    %412 = vmatpush.bf16.msra.mxu0 %v334
    %413 = vmatpush.bf16.msra.mxu0 %v332
    %414 = vmatpush.bf16.msra.mxu0 %v330
    %415 = vmatpush.bf16.msra.mxu0 %v328
    %416 = vmatpush.bf16.msra.mxu0 %v326
    %417 = vmatpush.bf16.msra.mxu0 %v324
    %418 = vmatpush.bf16.msra.mxu0 %v322
    %419 = vmatmul.bf16.gmra.mxu0 %v170
    %v420 = vpop.f32.mrf.mxu0
    %v421 = vadd.f32 %v407, %v420
    %v422 = vpop.f32.mrf.mxu0
    %v423 = vadd.f32 %v409, %v422
    %424 = vdwg.mxu0
    %v425 = vmax.f32 %v393, 0.0
    %v426 = vmax.f32 %v421, 0.0
    %v427 = vmax.f32 %v395, 0.0
    %v428 = vmax.f32 %v423, 0.0
    %v429 = vpack.c.bf16 %v427, %v425
    %v430 = vpack.c.bf16 %v428, %v426
    %v431 = vld [vmem:[%s5] sm:$0xff]
    %v432 = vld [vmem:[%s5 + $0x8] sm:$0xff]
    %v433 = vld [vmem:[%s5 + $0x10] sm:$0xff]
    %v434 = vld [vmem:[%s5 + $0x18] sm:$0xf]
    %v435 = vld [vmem:[%s5 + $0x1c] sm:$0xff]
    %v436 = vld [vmem:[%s5 + $0x24] sm:$0xff]
    %v437 = vld [vmem:[%s5 + $0x2c] sm:$0xff]
    %v438 = vld [vmem:[%s5 + $0x34] sm:$0xf]
    %v439 = vld [vmem:[%s5 + $0x38] sm:$0xff]
    %v440 = vld [vmem:[%s5 + $0x40] sm:$0xff]
    %v441 = vld [vmem:[%s5 + $0x48] sm:$0xff]
    %v442 = vld [vmem:[%s5 + $0x50] sm:$0xf]
    %v443 = vld [vmem:[%s5 + $0x54] sm:$0xff]
    %v444 = vld [vmem:[%s5 + $0x5c] sm:$0xff]
    %v445 = vld [vmem:[%s5 + $0x64] sm:$0xff]
    %v446 = vld [vmem:[%s5 + $0x6c] sm:$0xf]
    %v447 = vld [vmem:[%s5 + $0x70] sm:$0xff]
    %v448 = vld [vmem:[%s5 + $0x78] sm:$0xff]
    %v449 = vld [vmem:[%s5 + $0x80] sm:$0xff]
    %v450 = vld [vmem:[%s5 + $0x88] sm:$0xf]
    %v451 = vld [vmem:[%s5 + $0x8c] sm:$0xff]
    %v452 = vld [vmem:[%s5 + $0x94] sm:$0xff]
    %v453 = vld [vmem:[%s5 + $0x9c] sm:$0xff]
    %v454 = vld [vmem:[%s5 + $0xa4] sm:$0xf]
    %v455 = vld [vmem:[%s5 + $0xa8] sm:$0xff]
    %v456 = vld [vmem:[%s5 + $0xb0] sm:$0xff]
    %v457 = vld [vmem:[%s5 + $0xb8] sm:$0xff]
    %v458 = vld [vmem:[%s5 + $0xc0] sm:$0xf]
    %v459 = vld [vmem:[%s5 + $0xc4] sm:$0xff]
    %v460 = vld [vmem:[%s5 + $0xcc] sm:$0xff]
    %v461 = vld [vmem:[%s5 + $0xd4] sm:$0xff]
    %v462 = vld [vmem:[%s5 + $0xdc] sm:$0xf]
    %v463 = vld [vmem:[%s5 + $0xe0] sm:$0xff]
    %v464 = vld [vmem:[%s5 + $0xe8] sm:$0xff]
    %v465 = vld [vmem:[%s5 + $0xf0] sm:$0xff]
    %v466 = vld [vmem:[%s5 + $0xf8] sm:$0xf]
    %v467 = vld [vmem:[%s5 + $0xfc] sm:$0xff]
    %v468 = vld [vmem:[%s5 + $0x104] sm:$0xff]
    %v469 = vld [vmem:[%s5 + $0x10c] sm:$0xff]
    %v470 = vld [vmem:[%s5 + $0x114] sm:$0xf]
    %v471 = vld [vmem:[%s5 + $0x118] sm:$0xff]
    %v472 = vld [vmem:[%s5 + $0x120] sm:$0xff]
    %v473 = vld [vmem:[%s5 + $0x128] sm:$0xff]
    %v474 = vld [vmem:[%s5 + $0x130] sm:$0xf]
    %v475 = vld [vmem:[%s5 + $0x134] sm:$0xff]
    %v476 = vld [vmem:[%s5 + $0x13c] sm:$0xff]
    %v477 = vld [vmem:[%s5 + $0x144] sm:$0xff]
    %v478 = vld [vmem:[%s5 + $0x14c] sm:$0xf]
    %v479 = vld [vmem:[%s5 + $0x150] sm:$0xff]
    %v480 = vld [vmem:[%s5 + $0x158] sm:$0xff]
    %v481 = vld [vmem:[%s5 + $0x160] sm:$0xff]
    %v482 = vld [vmem:[%s5 + $0x168] sm:$0xf]
    %v483 = vld [vmem:[%s5 + $0x16c] sm:$0xff]
    %v484 = vld [vmem:[%s5 + $0x174] sm:$0xff]
    %v485 = vld [vmem:[%s5 + $0x17c] sm:$0xff]
    %v486 = vld [vmem:[%s5 + $0x184] sm:$0xf]
    %v487 = vld [vmem:[%s5 + $0x188] sm:$0xff]
    %v488 = vld [vmem:[%s5 + $0x190] sm:$0xff]
    %v489 = vld [vmem:[%s5 + $0x198] sm:$0xff]
    %v490 = vld [vmem:[%s5 + $0x1a0] sm:$0xf]
    %v491 = vld [vmem:[%s5 + $0x1a4] sm:$0xff]
    %v492 = vld [vmem:[%s5 + $0x1ac] sm:$0xff]
    %v493 = vld [vmem:[%s5 + $0x1b4] sm:$0xff]
    %v494 = vld [vmem:[%s5 + $0x1bc] sm:$0xf]
    %v495 = vld [vmem:[%s5 + $0x1c0] sm:$0xff]
    %v496 = vld [vmem:[%s5 + $0x1c8] sm:$0xff]
    %v497 = vld [vmem:[%s5 + $0x1d0] sm:$0xff]
    %v498 = vld [vmem:[%s5 + $0x1d8] sm:$0xf]
    %v499 = vld [vmem:[%s5 + $0x1dc] sm:$0xff]
    %v500 = vld [vmem:[%s5 + $0x1e4] sm:$0xff]
    %v501 = vld [vmem:[%s5 + $0x1ec] sm:$0xff]
    %v502 = vld [vmem:[%s5 + $0x1f4] sm:$0xf]
    %v503 = vld [vmem:[%s5 + $0x1f8] sm:$0xff]
    %v504 = vld [vmem:[%s5 + $0x200] sm:$0xff]
    %v505 = vld [vmem:[%s5 + $0x208] sm:$0xff]
    %v506 = vld [vmem:[%s5 + $0x210] sm:$0xf]
    %v507 = vld [vmem:[%s5 + $0x214] sm:$0xff]
    %v508 = vld [vmem:[%s5 + $0x21c] sm:$0xff]
    %v509 = vld [vmem:[%s5 + $0x224] sm:$0xff]
    %v510 = vld [vmem:[%s5 + $0x22c] sm:$0xf]
    %v511 = vld [vmem:[%s5 + $0x230] sm:$0xff]
    %v512 = vld [vmem:[%s5 + $0x238] sm:$0xff]
    %v513 = vld [vmem:[%s5 + $0x240] sm:$0xff]
    %v514 = vld [vmem:[%s5 + $0x248] sm:$0xf]
    %v515 = vld [vmem:[%s5 + $0x24c] sm:$0xff]
    %v516 = vld [vmem:[%s5 + $0x254] sm:$0xff]
    %v517 = vld [vmem:[%s5 + $0x25c] sm:$0xff]
    %v518 = vld [vmem:[%s5 + $0x264] sm:$0xf]
    %v519 = vld [vmem:[%s5 + $0x268] sm:$0xff]
    %v520 = vld [vmem:[%s5 + $0x270] sm:$0xff]
    %v521 = vld [vmem:[%s5 + $0x278] sm:$0xff]
    %v522 = vld [vmem:[%s5 + $0x280] sm:$0xf]
    %v523 = vld [vmem:[%s5 + $0x284] sm:$0xff]
    %v524 = vld [vmem:[%s5 + $0x28c] sm:$0xff]
    %v525 = vld [vmem:[%s5 + $0x294] sm:$0xff]
    %v526 = vld [vmem:[%s5 + $0x29c] sm:$0xf]
    %v527 = vld [vmem:[%s5 + $0x2a0] sm:$0xff]
    %v528 = vld [vmem:[%s5 + $0x2a8] sm:$0xff]
    %v529 = vld [vmem:[%s5 + $0x2b0] sm:$0xff]
    %v530 = vld [vmem:[%s5 + $0x2b8] sm:$0xf]
    %v531 = vld [vmem:[%s5 + $0x2bc] sm:$0xff]
    %v532 = vld [vmem:[%s5 + $0x2c4] sm:$0xff]
    %v533 = vld [vmem:[%s5 + $0x2cc] sm:$0xff]
    %v534 = vld [vmem:[%s5 + $0x2d4] sm:$0xf]
    %v535 = vld [vmem:[%s5 + $0x2d8] sm:$0xff]
    %v536 = vld [vmem:[%s5 + $0x2e0] sm:$0xff]
    %v537 = vld [vmem:[%s5 + $0x2e8] sm:$0xff]
    %v538 = vld [vmem:[%s5 + $0x2f0] sm:$0xf]
    %v539 = vld [vmem:[%s5 + $0x2f4] sm:$0xff]
    %v540 = vld [vmem:[%s5 + $0x2fc] sm:$0xff]
    %v541 = vld [vmem:[%s5 + $0x304] sm:$0xff]
    %v542 = vld [vmem:[%s5 + $0x30c] sm:$0xf]
    %v543 = vld [vmem:[%s5 + $0x310] sm:$0xff]
    %v544 = vld [vmem:[%s5 + $0x318] sm:$0xff]
    %v545 = vld [vmem:[%s5 + $0x320] sm:$0xff]
    %v546 = vld [vmem:[%s5 + $0x328] sm:$0xf]
    %v547 = vld [vmem:[%s5 + $0x32c] sm:$0xff]
    %v548 = vld [vmem:[%s5 + $0x334] sm:$0xff]
    %v549 = vld [vmem:[%s5 + $0x33c] sm:$0xff]
    %v550 = vld [vmem:[%s5 + $0x344] sm:$0xf]
    %v551 = vld [vmem:[%s5 + $0x348] sm:$0xff]
    %v552 = vld [vmem:[%s5 + $0x350] sm:$0xff]
    %v553 = vld [vmem:[%s5 + $0x358] sm:$0xff]
    %v554 = vld [vmem:[%s5 + $0x360] sm:$0xf]
    %v555 = vld [vmem:[%s5 + $0x364] sm:$0xff]
    %v556 = vld [vmem:[%s5 + $0x36c] sm:$0xff]
    %v557 = vld [vmem:[%s5 + $0x374] sm:$0xff]
    %v558 = vld [vmem:[%s5 + $0x37c] sm:$0xf]
    %v559 = vld [vmem:[%s6] sm:$0x7f]
    %v561 = vperm.slane %v559, 0
    %v562 = vperm.slane %v559, 1
    %v563 = vperm.slane %v559, 2
    %v564 = vperm.slane %v559, 3
    %v565 = vperm.slane %v559, 4
    %v566 = vperm.slane %v559, 5
    %v567 = vperm.slane %v559, 6
    %v703 = vunpack.c.l.b16 %v431
    %v704 = vunpack.c.h.b16 %v431
    %v705 = vunpack.c.l.b16 %v432
    %v706 = vunpack.c.h.b16 %v432
    %v707 = vunpack.c.l.b16 %v433
    %v708 = vunpack.c.h.b16 %v433
    %v709 = vunpack.c.l.b16 %v434
    %v710 = vunpack.c.l.b16 %v435
    %v711 = vunpack.c.h.b16 %v435
    %v712 = vunpack.c.l.b16 %v436
    %v713 = vunpack.c.h.b16 %v436
    %v714 = vunpack.c.l.b16 %v437
    %v715 = vunpack.c.h.b16 %v437
    %v716 = vunpack.c.l.b16 %v438
    %v717 = vunpack.c.l.b16 %v439
    %v718 = vunpack.c.h.b16 %v439
    %v719 = vunpack.c.l.b16 %v440
    %v720 = vunpack.c.h.b16 %v440
    %v721 = vunpack.c.l.b16 %v441
    %v722 = vunpack.c.h.b16 %v441
    %v723 = vunpack.c.l.b16 %v442
    %v724 = vunpack.c.l.b16 %v443
    %v725 = vunpack.c.h.b16 %v443
    %v726 = vunpack.c.l.b16 %v444
    %v727 = vunpack.c.h.b16 %v444
    %v728 = vunpack.c.l.b16 %v445
    %v729 = vunpack.c.h.b16 %v445
    %v730 = vunpack.c.l.b16 %v446
    %v731 = vunpack.c.l.b16 %v447
    %v732 = vunpack.c.h.b16 %v447
    %v733 = vunpack.c.l.b16 %v448
    %v734 = vunpack.c.h.b16 %v448
    %v735 = vunpack.c.l.b16 %v449
    %v736 = vunpack.c.h.b16 %v449
    %v737 = vunpack.c.l.b16 %v450
    %v738 = vunpack.c.l.b16 %v451
    %v739 = vunpack.c.h.b16 %v451
    %v740 = vunpack.c.l.b16 %v452
    %v741 = vunpack.c.h.b16 %v452
    %v742 = vunpack.c.l.b16 %v453
    %v743 = vunpack.c.h.b16 %v453
    %v744 = vunpack.c.l.b16 %v454
    %v745 = vunpack.c.l.b16 %v455
    %v746 = vunpack.c.h.b16 %v455
    %v747 = vunpack.c.l.b16 %v456
    %v748 = vunpack.c.h.b16 %v456
    %v749 = vunpack.c.l.b16 %v457
    %v750 = vunpack.c.h.b16 %v457
    %v751 = vunpack.c.l.b16 %v458
    %v752 = vunpack.c.l.b16 %v459
    %v753 = vunpack.c.h.b16 %v459
    %v754 = vunpack.c.l.b16 %v460
    %v755 = vunpack.c.h.b16 %v460
    %v756 = vunpack.c.l.b16 %v461
    %v757 = vunpack.c.h.b16 %v461
    %v758 = vunpack.c.l.b16 %v462
    %v759 = vunpack.c.l.b16 %v463
    %v760 = vunpack.c.h.b16 %v463
    %v761 = vunpack.c.l.b16 %v464
    %v762 = vunpack.c.h.b16 %v464
    %v763 = vunpack.c.l.b16 %v465
    %v764 = vunpack.c.h.b16 %v465
    %v765 = vunpack.c.l.b16 %v466
    %v766 = vunpack.c.l.b16 %v467
    %v767 = vunpack.c.h.b16 %v467
    %v768 = vunpack.c.l.b16 %v468
    %v769 = vunpack.c.h.b16 %v468
    %v770 = vunpack.c.l.b16 %v469
    %v771 = vunpack.c.h.b16 %v469
    %v772 = vunpack.c.l.b16 %v470
    %v773 = vunpack.c.l.b16 %v471
    %v774 = vunpack.c.h.b16 %v471
    %v775 = vunpack.c.l.b16 %v472
    %v776 = vunpack.c.h.b16 %v472
    %v777 = vunpack.c.l.b16 %v473
    %v778 = vunpack.c.h.b16 %v473
    %v779 = vunpack.c.l.b16 %v474
    %v780 = vunpack.c.l.b16 %v475
    %v781 = vunpack.c.h.b16 %v475
    %v782 = vunpack.c.l.b16 %v476
    %v783 = vunpack.c.h.b16 %v476
    %v784 = vunpack.c.l.b16 %v477
    %v785 = vunpack.c.h.b16 %v477
    %v786 = vunpack.c.l.b16 %v478
    %v787 = vunpack.c.l.b16 %v479
    %v788 = vunpack.c.h.b16 %v479
    %v789 = vunpack.c.l.b16 %v480
    %v790 = vunpack.c.h.b16 %v480
    %v791 = vunpack.c.l.b16 %v481
    %v792 = vunpack.c.h.b16 %v481
    %v793 = vunpack.c.l.b16 %v482
    %v794 = vunpack.c.l.b16 %v483
    %v795 = vunpack.c.h.b16 %v483
    %v796 = vunpack.c.l.b16 %v484
    %v797 = vunpack.c.h.b16 %v484
    %v798 = vunpack.c.l.b16 %v485
    %v799 = vunpack.c.h.b16 %v485
    %v800 = vunpack.c.l.b16 %v486
    %v801 = vunpack.c.l.b16 %v487
    %v802 = vunpack.c.h.b16 %v487
    %v803 = vunpack.c.l.b16 %v488
    %v804 = vunpack.c.h.b16 %v488
    %v805 = vunpack.c.l.b16 %v489
    %v806 = vunpack.c.h.b16 %v489
    %v807 = vunpack.c.l.b16 %v490
    %v808 = vunpack.c.l.b16 %v491
    %v809 = vunpack.c.h.b16 %v491
    %v810 = vunpack.c.l.b16 %v492
    %v811 = vunpack.c.h.b16 %v492
    %v812 = vunpack.c.l.b16 %v493
    %v813 = vunpack.c.h.b16 %v493
    %v814 = vunpack.c.l.b16 %v494
    %v815 = vunpack.c.l.b16 %v495
    %v816 = vunpack.c.h.b16 %v495
    %v817 = vunpack.c.l.b16 %v496
    %v818 = vunpack.c.h.b16 %v496
    %v819 = vunpack.c.l.b16 %v497
    %v820 = vunpack.c.h.b16 %v497
    %v821 = vunpack.c.l.b16 %v498
    %v822 = vunpack.c.l.b16 %v499
    %v823 = vunpack.c.h.b16 %v499
    %v824 = vunpack.c.l.b16 %v500
    %v825 = vunpack.c.h.b16 %v500
    %v826 = vunpack.c.l.b16 %v501
    %v827 = vunpack.c.h.b16 %v501
    %v828 = vunpack.c.l.b16 %v502
    %v829 = vunpack.c.l.b16 %v503
    %v830 = vunpack.c.h.b16 %v503
    %v831 = vunpack.c.l.b16 %v504
    %v832 = vunpack.c.h.b16 %v504
    %v833 = vunpack.c.l.b16 %v505
    %v834 = vunpack.c.h.b16 %v505
    %v835 = vunpack.c.l.b16 %v506
    %v836 = vunpack.c.l.b16 %v507
    %v837 = vunpack.c.h.b16 %v507
    %v838 = vunpack.c.l.b16 %v508
    %v839 = vunpack.c.h.b16 %v508
    %v840 = vunpack.c.l.b16 %v509
    %v841 = vunpack.c.h.b16 %v509
    %v842 = vunpack.c.l.b16 %v510
    %v843 = vunpack.c.l.b16 %v511
    %v844 = vunpack.c.h.b16 %v511
    %v845 = vunpack.c.l.b16 %v512
    %v846 = vunpack.c.h.b16 %v512
    %v847 = vunpack.c.l.b16 %v513
    %v848 = vunpack.c.h.b16 %v513
    %v849 = vunpack.c.l.b16 %v514
    %v850 = vunpack.c.l.b16 %v515
    %v851 = vunpack.c.h.b16 %v515
    %v852 = vunpack.c.l.b16 %v516
    %v853 = vunpack.c.h.b16 %v516
    %v854 = vunpack.c.l.b16 %v517
    %v855 = vunpack.c.h.b16 %v517
    %v856 = vunpack.c.l.b16 %v518
    %v857 = vunpack.c.l.b16 %v519
    %v858 = vunpack.c.h.b16 %v519
    %v859 = vunpack.c.l.b16 %v520
    %v860 = vunpack.c.h.b16 %v520
    %v861 = vunpack.c.l.b16 %v521
    %v862 = vunpack.c.h.b16 %v521
    %v863 = vunpack.c.l.b16 %v522
    %v864 = vunpack.c.l.b16 %v523
    %v865 = vunpack.c.h.b16 %v523
    %v866 = vunpack.c.l.b16 %v524
    %v867 = vunpack.c.h.b16 %v524
    %v868 = vunpack.c.l.b16 %v525
    %v869 = vunpack.c.h.b16 %v525
    %v870 = vunpack.c.l.b16 %v526
    %v871 = vunpack.c.l.b16 %v527
    %v872 = vunpack.c.h.b16 %v527
    %v873 = vunpack.c.l.b16 %v528
    %v874 = vunpack.c.h.b16 %v528
    %v875 = vunpack.c.l.b16 %v529
    %v876 = vunpack.c.h.b16 %v529
    %v877 = vunpack.c.l.b16 %v530
    %v878 = vunpack.c.l.b16 %v531
    %v879 = vunpack.c.h.b16 %v531
    %v880 = vunpack.c.l.b16 %v532
    %v881 = vunpack.c.h.b16 %v532
    %v882 = vunpack.c.l.b16 %v533
    %v883 = vunpack.c.h.b16 %v533
    %v884 = vunpack.c.l.b16 %v534
    %v885 = vunpack.c.l.b16 %v535
    %v886 = vunpack.c.h.b16 %v535
    %v887 = vunpack.c.l.b16 %v536
    %v888 = vunpack.c.h.b16 %v536
    %v889 = vunpack.c.l.b16 %v537
    %v890 = vunpack.c.h.b16 %v537
    %v891 = vunpack.c.l.b16 %v538
    %v892 = vunpack.c.l.b16 %v539
    %v893 = vunpack.c.h.b16 %v539
    %v894 = vunpack.c.l.b16 %v540
    %v895 = vunpack.c.h.b16 %v540
    %v896 = vunpack.c.l.b16 %v541
    %v897 = vunpack.c.h.b16 %v541
    %v898 = vunpack.c.l.b16 %v542
    %v899 = vunpack.c.l.b16 %v543
    %v900 = vunpack.c.h.b16 %v543
    %v901 = vunpack.c.l.b16 %v544
    %v902 = vunpack.c.h.b16 %v544
    %v903 = vunpack.c.l.b16 %v545
    %v904 = vunpack.c.h.b16 %v545
    %v905 = vunpack.c.l.b16 %v546
    %v906 = vunpack.c.l.b16 %v547
    %v907 = vunpack.c.h.b16 %v547
    %v908 = vunpack.c.l.b16 %v548
    %v909 = vunpack.c.h.b16 %v548
    %v910 = vunpack.c.l.b16 %v549
    %v911 = vunpack.c.h.b16 %v549
    %v912 = vunpack.c.l.b16 %v550
    %v913 = vunpack.c.l.b16 %v551
    %v914 = vunpack.c.h.b16 %v551
    %v915 = vunpack.c.l.b16 %v552
    %v916 = vunpack.c.h.b16 %v552
    %v917 = vunpack.c.l.b16 %v553
    %v918 = vunpack.c.h.b16 %v553
    %v919 = vunpack.c.l.b16 %v554
    %v920 = vunpack.c.l.b16 %v555
    %v921 = vunpack.c.h.b16 %v555
    %v922 = vunpack.c.l.b16 %v556
    %v923 = vunpack.c.h.b16 %v556
    %v924 = vunpack.c.l.b16 %v557
    %v925 = vunpack.c.h.b16 %v557
    %v926 = vunpack.c.l.b16 %v558
    %v927 = vpack.c.b16 %v710, %v703
    %v928 = vpack.c.b16 %v711, %v704
    %v929 = vpack.c.b16 %v712, %v705
    %v930 = vpack.c.b16 %v713, %v706
    %v931 = vpack.c.b16 %v714, %v707
    %v932 = vpack.c.b16 %v715, %v708
    %v933 = vpack.c.b16 %v716, %v709
    %v934 = vpack.c.b16 %v724, %v717
    %v935 = vpack.c.b16 %v725, %v718
    %v936 = vpack.c.b16 %v726, %v719
    %v937 = vpack.c.b16 %v727, %v720
    %v938 = vpack.c.b16 %v728, %v721
    %v939 = vpack.c.b16 %v729, %v722
    %v940 = vpack.c.b16 %v730, %v723
    %v941 = vpack.c.b16 %v738, %v731
    %v942 = vpack.c.b16 %v739, %v732
    %v943 = vpack.c.b16 %v740, %v733
    %v944 = vpack.c.b16 %v741, %v734
    %v945 = vpack.c.b16 %v742, %v735
    %v946 = vpack.c.b16 %v743, %v736
    %v947 = vpack.c.b16 %v744, %v737
    %v948 = vpack.c.b16 %v752, %v745
    %v949 = vpack.c.b16 %v753, %v746
    %v950 = vpack.c.b16 %v754, %v747
    %v951 = vpack.c.b16 %v755, %v748
    %v952 = vpack.c.b16 %v756, %v749
    %v953 = vpack.c.b16 %v757, %v750
    %v954 = vpack.c.b16 %v758, %v751
    %v955 = vpack.c.b16 %v766, %v759
    %v956 = vpack.c.b16 %v767, %v760
    %v957 = vpack.c.b16 %v768, %v761
    %v958 = vpack.c.b16 %v769, %v762
    %v959 = vpack.c.b16 %v770, %v763
    %v960 = vpack.c.b16 %v771, %v764
    %v961 = vpack.c.b16 %v772, %v765
    %v962 = vpack.c.b16 %v780, %v773
    %v963 = vpack.c.b16 %v781, %v774
    %v964 = vpack.c.b16 %v782, %v775
    %v965 = vpack.c.b16 %v783, %v776
    %v966 = vpack.c.b16 %v784, %v777
    %v967 = vpack.c.b16 %v785, %v778
    %v968 = vpack.c.b16 %v786, %v779
    %v969 = vpack.c.b16 %v794, %v787
    %v970 = vpack.c.b16 %v795, %v788
    %v971 = vpack.c.b16 %v796, %v789
    %v972 = vpack.c.b16 %v797, %v790
    %v973 = vpack.c.b16 %v798, %v791
    %v974 = vpack.c.b16 %v799, %v792
    %v975 = vpack.c.b16 %v800, %v793
    %v976 = vpack.c.b16 %v808, %v801
    %v977 = vpack.c.b16 %v809, %v802
    %v978 = vpack.c.b16 %v810, %v803
    %v979 = vpack.c.b16 %v811, %v804
    %v980 = vpack.c.b16 %v812, %v805
    %v981 = vpack.c.b16 %v813, %v806
    %v982 = vpack.c.b16 %v814, %v807
    %v983 = vpack.c.b16 %v822, %v815
    %v984 = vpack.c.b16 %v823, %v816
    %v985 = vpack.c.b16 %v824, %v817
    %v986 = vpack.c.b16 %v825, %v818
    %v987 = vpack.c.b16 %v826, %v819
    %v988 = vpack.c.b16 %v827, %v820
    %v989 = vpack.c.b16 %v828, %v821
    %v990 = vpack.c.b16 %v836, %v829
    %v991 = vpack.c.b16 %v837, %v830
    %v992 = vpack.c.b16 %v838, %v831
    %v993 = vpack.c.b16 %v839, %v832
    %v994 = vpack.c.b16 %v840, %v833
    %v995 = vpack.c.b16 %v841, %v834
    %v996 = vpack.c.b16 %v842, %v835
    %v997 = vpack.c.b16 %v850, %v843
    %v998 = vpack.c.b16 %v851, %v844
    %v999 = vpack.c.b16 %v852, %v845
    %v1000 = vpack.c.b16 %v853, %v846
    %v1001 = vpack.c.b16 %v854, %v847
    %v1002 = vpack.c.b16 %v855, %v848
    %v1003 = vpack.c.b16 %v856, %v849
    %v1004 = vpack.c.b16 %v864, %v857
    %v1005 = vpack.c.b16 %v865, %v858
    %v1006 = vpack.c.b16 %v866, %v859
    %v1007 = vpack.c.b16 %v867, %v860
    %v1008 = vpack.c.b16 %v868, %v861
    %v1009 = vpack.c.b16 %v869, %v862
    %v1010 = vpack.c.b16 %v870, %v863
    %v1011 = vpack.c.b16 %v878, %v871
    %v1012 = vpack.c.b16 %v879, %v872
    %v1013 = vpack.c.b16 %v880, %v873
    %v1014 = vpack.c.b16 %v881, %v874
    %v1015 = vpack.c.b16 %v882, %v875
    %v1016 = vpack.c.b16 %v883, %v876
    %v1017 = vpack.c.b16 %v884, %v877
    %v1018 = vpack.c.b16 %v892, %v885
    %v1019 = vpack.c.b16 %v893, %v886
    %v1020 = vpack.c.b16 %v894, %v887
    %v1021 = vpack.c.b16 %v895, %v888
    %v1022 = vpack.c.b16 %v896, %v889
    %v1023 = vpack.c.b16 %v897, %v890
    %v1024 = vpack.c.b16 %v898, %v891
    %v1025 = vpack.c.b16 %v906, %v899
    %v1026 = vpack.c.b16 %v907, %v900
    %v1027 = vpack.c.b16 %v908, %v901
    %v1028 = vpack.c.b16 %v909, %v902
    %v1029 = vpack.c.b16 %v910, %v903
    %v1030 = vpack.c.b16 %v911, %v904
    %v1031 = vpack.c.b16 %v912, %v905
    %v1032 = vpack.c.b16 %v920, %v913
    %v1033 = vpack.c.b16 %v921, %v914
    %v1034 = vpack.c.b16 %v922, %v915
    %v1035 = vpack.c.b16 %v923, %v916
    %v1036 = vpack.c.b16 %v924, %v917
    %v1037 = vpack.c.b16 %v925, %v918
    %v1038 = vpack.c.b16 %v926, %v919
    %1151 = vmatpush.bf16.msra.mxu0 %v976
    %1152 = vmatpush.bf16.msra.mxu0 %v969
    %1153 = vmatpush.bf16.msra.mxu0 %v962
    %1154 = vmatpush.bf16.msra.mxu0 %v955
    %1155 = vmatpush.bf16.msra.mxu0 %v948
    %1156 = vmatpush.bf16.msra.mxu0 %v941
    %1157 = vmatpush.bf16.msra.mxu0 %v934
    %1158 = vmatpush.bf16.msra.mxu0 %v927
    %1159 = vmatmul.bf16.gmra.mxu0 %v429
    %v1160 = vpop.f32.mrf.mxu0
    %v1161 = vadd.f32 %v561, %v1160
    %v1162 = vpop.f32.mrf.mxu0
    %v1163 = vadd.f32 %v561, %v1162
    %1164 = vdwg.mxu0
    %1165 = vmatpush.bf16.msra.mxu0 %v1032
    %1166 = vmatpush.bf16.msra.mxu0 %v1025
    %1167 = vmatpush.bf16.msra.mxu0 %v1018
    %1168 = vmatpush.bf16.msra.mxu0 %v1011
    %1169 = vmatpush.bf16.msra.mxu0 %v1004
    %1170 = vmatpush.bf16.msra.mxu0 %v997
    %1171 = vmatpush.bf16.msra.mxu0 %v990
    %1172 = vmatpush.bf16.msra.mxu0 %v983
    %1173 = vmatmul.bf16.gmra.mxu0 %v430
    %v1174 = vpop.f32.mrf.mxu0
    %v1175 = vadd.f32 %v1161, %v1174
    %v1176 = vpop.f32.mrf.mxu0
    %v1177 = vadd.f32 %v1163, %v1176
    %1178 = vdwg.mxu0
    %1179 = vmatpush.bf16.msra.mxu0 %v977
    %1180 = vmatpush.bf16.msra.mxu0 %v970
    %1181 = vmatpush.bf16.msra.mxu0 %v963
    %1182 = vmatpush.bf16.msra.mxu0 %v956
    %1183 = vmatpush.bf16.msra.mxu0 %v949
    %1184 = vmatpush.bf16.msra.mxu0 %v942
    %1185 = vmatpush.bf16.msra.mxu0 %v935
    %1186 = vmatpush.bf16.msra.mxu0 %v928
    %1187 = vmatmul.bf16.gmra.mxu0 %v429
    %v1188 = vpop.f32.mrf.mxu0
    %v1189 = vadd.f32 %v562, %v1188
    %v1190 = vpop.f32.mrf.mxu0
    %v1191 = vadd.f32 %v562, %v1190
    %1192 = vdwg.mxu0
    %1193 = vmatpush.bf16.msra.mxu0 %v1033
    %1194 = vmatpush.bf16.msra.mxu0 %v1026
    %1195 = vmatpush.bf16.msra.mxu0 %v1019
    %1196 = vmatpush.bf16.msra.mxu0 %v1012
    %1197 = vmatpush.bf16.msra.mxu0 %v1005
    %1198 = vmatpush.bf16.msra.mxu0 %v998
    %1199 = vmatpush.bf16.msra.mxu0 %v991
    %1200 = vmatpush.bf16.msra.mxu0 %v984
    %1201 = vmatmul.bf16.gmra.mxu0 %v430
    %v1202 = vpop.f32.mrf.mxu0
    %v1203 = vadd.f32 %v1189, %v1202
    %v1204 = vpop.f32.mrf.mxu0
    %v1205 = vadd.f32 %v1191, %v1204
    %1206 = vdwg.mxu0
    %1207 = vmatpush.bf16.msra.mxu0 %v978
    %1208 = vmatpush.bf16.msra.mxu0 %v971
    %1209 = vmatpush.bf16.msra.mxu0 %v964
    %1210 = vmatpush.bf16.msra.mxu0 %v957
    %1211 = vmatpush.bf16.msra.mxu0 %v950
    %1212 = vmatpush.bf16.msra.mxu0 %v943
    %1213 = vmatpush.bf16.msra.mxu0 %v936
    %1214 = vmatpush.bf16.msra.mxu0 %v929
    %1215 = vmatmul.bf16.gmra.mxu0 %v429
    %v1216 = vpop.f32.mrf.mxu0
    %v1217 = vadd.f32 %v563, %v1216
    %v1218 = vpop.f32.mrf.mxu0
    %v1219 = vadd.f32 %v563, %v1218
    %1220 = vdwg.mxu0
    %1221 = vmatpush.bf16.msra.mxu0 %v1034
    %1222 = vmatpush.bf16.msra.mxu0 %v1027
    %1223 = vmatpush.bf16.msra.mxu0 %v1020
    %1224 = vmatpush.bf16.msra.mxu0 %v1013
    %1225 = vmatpush.bf16.msra.mxu0 %v1006
    %1226 = vmatpush.bf16.msra.mxu0 %v999
    %1227 = vmatpush.bf16.msra.mxu0 %v992
    %1228 = vmatpush.bf16.msra.mxu0 %v985
    %1229 = vmatmul.bf16.gmra.mxu0 %v430
    %v1230 = vpop.f32.mrf.mxu0
    %v1231 = vadd.f32 %v1217, %v1230
    %v1232 = vpop.f32.mrf.mxu0
    %v1233 = vadd.f32 %v1219, %v1232
    %1234 = vdwg.mxu0
    %1235 = vmatpush.bf16.msra.mxu0 %v979
    %1236 = vmatpush.bf16.msra.mxu0 %v972
    %1237 = vmatpush.bf16.msra.mxu0 %v965
    %1238 = vmatpush.bf16.msra.mxu0 %v958
    %1239 = vmatpush.bf16.msra.mxu0 %v951
    %1240 = vmatpush.bf16.msra.mxu0 %v944
    %1241 = vmatpush.bf16.msra.mxu0 %v937
    %1242 = vmatpush.bf16.msra.mxu0 %v930
    %1243 = vmatmul.bf16.gmra.mxu0 %v429
    %v1244 = vpop.f32.mrf.mxu0
    %v1245 = vadd.f32 %v564, %v1244
    %v1246 = vpop.f32.mrf.mxu0
    %v1247 = vadd.f32 %v564, %v1246
    %1248 = vdwg.mxu0
    %1249 = vmatpush.bf16.msra.mxu0 %v1035
    %1250 = vmatpush.bf16.msra.mxu0 %v1028
    %1251 = vmatpush.bf16.msra.mxu0 %v1021
    %1252 = vmatpush.bf16.msra.mxu0 %v1014
    %1253 = vmatpush.bf16.msra.mxu0 %v1007
    %1254 = vmatpush.bf16.msra.mxu0 %v1000
    %1255 = vmatpush.bf16.msra.mxu0 %v993
    %1256 = vmatpush.bf16.msra.mxu0 %v986
    %1257 = vmatmul.bf16.gmra.mxu0 %v430
    %v1258 = vpop.f32.mrf.mxu0
    %v1259 = vadd.f32 %v1245, %v1258
    %v1260 = vpop.f32.mrf.mxu0
    %v1261 = vadd.f32 %v1247, %v1260
    %1262 = vdwg.mxu0
    %1263 = vmatpush.bf16.msra.mxu0 %v980
    %1264 = vmatpush.bf16.msra.mxu0 %v973
    %1265 = vmatpush.bf16.msra.mxu0 %v966
    %1266 = vmatpush.bf16.msra.mxu0 %v959
    %1267 = vmatpush.bf16.msra.mxu0 %v952
    %1268 = vmatpush.bf16.msra.mxu0 %v945
    %1269 = vmatpush.bf16.msra.mxu0 %v938
    %1270 = vmatpush.bf16.msra.mxu0 %v931
    %1271 = vmatmul.bf16.gmra.mxu0 %v429
    %v1272 = vpop.f32.mrf.mxu0
    %v1273 = vadd.f32 %v565, %v1272
    %v1274 = vpop.f32.mrf.mxu0
    %v1275 = vadd.f32 %v565, %v1274
    %1276 = vdwg.mxu0
    %1277 = vmatpush.bf16.msra.mxu0 %v1036
    %1278 = vmatpush.bf16.msra.mxu0 %v1029
    %1279 = vmatpush.bf16.msra.mxu0 %v1022
    %1280 = vmatpush.bf16.msra.mxu0 %v1015
    %1281 = vmatpush.bf16.msra.mxu0 %v1008
    %1282 = vmatpush.bf16.msra.mxu0 %v1001
    %1283 = vmatpush.bf16.msra.mxu0 %v994
    %1284 = vmatpush.bf16.msra.mxu0 %v987
    %1285 = vmatmul.bf16.gmra.mxu0 %v430
    %v1286 = vpop.f32.mrf.mxu0
    %v1287 = vadd.f32 %v1273, %v1286
    %v1288 = vpop.f32.mrf.mxu0
    %v1289 = vadd.f32 %v1275, %v1288
    %1290 = vdwg.mxu0
    %1291 = vmatpush.bf16.msra.mxu0 %v981
    %1292 = vmatpush.bf16.msra.mxu0 %v974
    %1293 = vmatpush.bf16.msra.mxu0 %v967
    %1294 = vmatpush.bf16.msra.mxu0 %v960
    %1295 = vmatpush.bf16.msra.mxu0 %v953
    %1296 = vmatpush.bf16.msra.mxu0 %v946
    %1297 = vmatpush.bf16.msra.mxu0 %v939
    %1298 = vmatpush.bf16.msra.mxu0 %v932
    %1299 = vmatmul.bf16.gmra.mxu0 %v429
    %v1300 = vpop.f32.mrf.mxu0
    %v1301 = vadd.f32 %v566, %v1300
    %v1302 = vpop.f32.mrf.mxu0
    %v1303 = vadd.f32 %v566, %v1302
    %1304 = vdwg.mxu0
    %1305 = vmatpush.bf16.msra.mxu0 %v1037
    %1306 = vmatpush.bf16.msra.mxu0 %v1030
    %1307 = vmatpush.bf16.msra.mxu0 %v1023
    %1308 = vmatpush.bf16.msra.mxu0 %v1016
    %1309 = vmatpush.bf16.msra.mxu0 %v1009
    %1310 = vmatpush.bf16.msra.mxu0 %v1002
    %1311 = vmatpush.bf16.msra.mxu0 %v995
    %1312 = vmatpush.bf16.msra.mxu0 %v988
    %1313 = vmatmul.bf16.gmra.mxu0 %v430
    %v1314 = vpop.f32.mrf.mxu0
    %v1315 = vadd.f32 %v1301, %v1314
    %v1316 = vpop.f32.mrf.mxu0
    %v1317 = vadd.f32 %v1303, %v1316
    %1318 = vdwg.mxu0
    %1319 = vmatpush.bf16.msra.mxu0 %v982
    %1320 = vmatpush.bf16.msra.mxu0 %v975
    %1321 = vmatpush.bf16.msra.mxu0 %v968
    %1322 = vmatpush.bf16.msra.mxu0 %v961
    %1323 = vmatpush.bf16.msra.mxu0 %v954
    %1324 = vmatpush.bf16.msra.mxu0 %v947
    %1325 = vmatpush.bf16.msra.mxu0 %v940
    %1326 = vmatpush.bf16.msra.mxu0 %v933
    %1327 = vmatmul.bf16.gmra.mxu0 %v429
    %v1328 = vpop.f32.mrf.mxu0
    %v1329 = vadd.f32 %v567, %v1328
    %v1330 = vpop.f32.mrf.mxu0
    %v1331 = vadd.f32 %v567, %v1330
    %1332 = vdwg.mxu0
    %1333 = vmatpush.bf16.msra.mxu0 %v1038
    %1334 = vmatpush.bf16.msra.mxu0 %v1031
    %1335 = vmatpush.bf16.msra.mxu0 %v1024
    %1336 = vmatpush.bf16.msra.mxu0 %v1017
    %1337 = vmatpush.bf16.msra.mxu0 %v1010
    %1338 = vmatpush.bf16.msra.mxu0 %v1003
    %1339 = vmatpush.bf16.msra.mxu0 %v996
    %1340 = vmatpush.bf16.msra.mxu0 %v989
    %1341 = vmatmul.bf16.gmra.mxu0 %v430
    %v1342 = vpop.f32.mrf.mxu0
    %v1343 = vadd.f32 %v1329, %v1342
    %v1344 = vpop.f32.mrf.mxu0
    %v1345 = vadd.f32 %v1331, %v1344
    %1346 = vdwg.mxu0
    %v1347 = vtanh.pop %v1175
    %v1348 = vtanh.pop %v1203
    %v1349 = vtanh.pop %v1231
    %v1350 = vtanh.pop %v1259
    %v1351 = vtanh.pop %v1287
    %v1352 = vtanh.pop %v1315
    %v1353 = vtanh.pop %v1343
    %v1354 = vtanh.pop %v1177
    %v1355 = vtanh.pop %v1205
    %v1356 = vtanh.pop %v1233
    %v1357 = vtanh.pop %v1261
    %v1358 = vtanh.pop %v1289
    %v1359 = vtanh.pop %v1317
    %v1360 = vtanh.pop %v1345
    %v1361 = vpack.c.bf16 %v1348, %v1347
    %v1362 = vpack.c.bf16 %v1350, %v1349
    %v1363 = vpack.c.bf16 %v1352, %v1351
    %v1364 = vpack.c.bf16 %v1353, %v1353
    %v1365 = vpack.c.bf16 %v1355, %v1354
    %v1366 = vpack.c.bf16 %v1357, %v1356
    %v1367 = vpack.c.bf16 %v1359, %v1358
    %v1368 = vpack.c.bf16 %v1360, %v1360
    %1369 = vst [vmem:[#allocation2] sm:$0xff] %v1361
    %1370 = vst [vmem:[#allocation2 + $0x8] sm:$0xff] %v1362
    %1371 = vst [vmem:[#allocation2 + $0x10] sm:$0xff] %v1363
    %vm1372 = vcmask 125952
    %1373 = vst.msk [vmem:[#allocation2 + $0x18] sm:$0xf] %vm1372, %v1364
    %1374 = vst [vmem:[#allocation2 + $0x1c] sm:$0xff] %v1365
    %1375 = vst [vmem:[#allocation2 + $0x24] sm:$0xff] %v1366
    %1376 = vst [vmem:[#allocation2 + $0x2c] sm:$0xff] %v1367
    %1377 = vst.msk [vmem:[#allocation2 + $0x34] sm:$0xf] %vm1372, %v1368
    // Predicated region
    $region30: #{tpu_custom_call.1} parent=1 // pred_check
      _
    $region31: #{tpu_custom_call.1} parent=1 // pred_check_branch
      %1379 = sbr.rel (0) target = $region33
    $region32: #{tpu_custom_call.1} parent=1 // pred_region
      %1381 = vsyncadd [#allocation3], 0
      %s1382 = sshll.u32 [#allocation2], 4
      %s1383 = int_to_ptr.vmem [resolvable:$true] %s1382
      %s1384 = sshll.u32 %s7, 4
      %s1385 = int_to_ptr.hbm [resolvable:$true] %s1384
      %1390 = dma.vmem_to_hbm [thread:$0]  %s1383, 896, %s1385, [#allocation3], 448, 448, 28
    $region33: #{tpu_custom_call.1} parent=1 // pred_fallthru
      _
    // Predicated region
    $region34: #{tpu_custom_call.1} parent=1 // pred_check
      _
    $region35: #{tpu_custom_call.1} parent=1 // pred_check_branch
      %1392 = sbr.rel (0) target = $region37
    $region36: #{tpu_custom_call.1} parent=1 // pred_region
      %1394 = dma.done [#allocation3], 896
    $region37: #{tpu_custom_call.1} parent=1 // pred_fallthru
      _
    %1395 = vsyncpa [#allocation3], 1

</llo_original>
